<compile_context>
chip_gen: v6e
topology: v6e:2x2x1
jax: 0.10.0
libtpu: 0.0.40
codegen_flags: <defaults>
</compile_context>

<pallas_src>
import functools

import jax
import jax.numpy as jnp
from jax.experimental import pallas as pl
from jax.experimental.pallas import tpu as pltpu


def _round_up(v, m):
    return -(-v // m) * m


def _pad_to(a, shape):
    pads = [(0, t - s) for s, t in zip(a.shape, shape)]
    if any(p[1] for p in pads):
        a = jnp.pad(a, pads)
    return a


def _vmem_caps():
    """(physical VMEM bytes, usable budget) for the current TPU generation."""
    cap = 128 << 20
    try:
        info = pltpu.get_tpu_info()
        cap = int(getattr(info, "vmem_capacity_bytes", cap))
    except Exception:
        pass
    # Leave compiler headroom: ~100 MiB usable on 128 MiB parts (v5e/v6e),
    # ~51 MiB on 64 MiB parts (v7x).
    usable = max(min(cap - (12 << 20), int(cap * 0.8)), 16 << 20)
    return cap, usable


# ----------------------------------------------------------------------------
# K == 1: the shift operator is never read -> drop S from in_specs entirely.
# ----------------------------------------------------------------------------
def _gf_k1_kernel(x_ref, w0_ref, b_ref, y_ref):
    # x_ref: (1, Gp, Np) f32;  w0_ref: (Fp, Gp) f32 (= sum_e h[:,e,0,:]);
    # b_ref: (Fp, 1) f32;      y_ref: (1, Fp, Np)
    y_ref[0] = (jnp.dot(w0_ref[...], x_ref[0],
                        preferred_element_type=jnp.float32)
                + b_ref[...]).astype(y_ref.dtype)


# ----------------------------------------------------------------------------
# Small path: all E edges of a batch block resident in VMEM.
# ----------------------------------------------------------------------------
def _gf_block_kernel(x_ref, s_ref, w_ref, b_ref, y_ref, z_ref, *,
                     Bb, E, K, Gp, Np, s_dtype):
    # x_ref: (Bb, Gp, Np) f32
    # s_ref: (Bb, E, Np, Np) s_dtype
    # w_ref: (Fp, R) f32, R = (1 + E*(K-1)) * Gp, columns:
    #        [ folded k=0 | (e=0,k=1..K-1) | ... | (e=E-1,k=1..K-1) ]
    # b_ref: (Fp, 1) f32
    # y_ref: (Bb, Fp, Np)
    # z_ref: (R, Bb*Np) f32 scratch — all taps of the whole batch block
    for b in range(Bb):
        col = b * Np
        x_b = x_ref[b]                                    # (Gp, Np) f32
        z_ref[0:Gp, col:col + Np] = x_b                   # folded k=0 tap
        for e in range(E):
            s_e = s_ref[b, e]                             # (Np, Np) s_dtype
            xc = x_b
            for k in range(1, K):
                # one diffusion hop; state stays f32, operand cast for the MXU
                xc = jnp.dot(xc.astype(s_dtype), s_e,
                             preferred_element_type=jnp.float32)
                row = Gp * (1 + e * (K - 1) + (k - 1))
                z_ref[row:row + Gp, col:col + Np] = xc
    # ONE fused contraction for the whole batch block: (Fp, R) @ (R, Bb*Np)
    acc = jnp.dot(w_ref[...], z_ref[...], preferred_element_type=jnp.float32)
    bias = b_ref[...]
    for b in range(Bb):
        y_ref[b] = (acc[:, b * Np:(b + 1) * Np] + bias).astype(y_ref.dtype)


# ----------------------------------------------------------------------------
# Per-edge resident path: grid (batch, edge); S[b,e] streamed exactly once.
# ----------------------------------------------------------------------------
def _gf_edge_kernel(x_ref, s_ref, w0_ref, we_ref, b_ref, y_ref, z_ref, acc_ref,
                    *, E, K, Gp, s_dtype):
    # x_ref:  (1, Gp, Np) f32          w0_ref: (Fp, Gp) f32 (folded k=0)
    # s_ref:  (1, 1, Np, Np) s_dtype   we_ref: (1, Fp, (K-1)*Gp) f32
    # b_ref:  (Fp, 1) f32              y_ref:  (1, Fp, Np)  (resident over e)
    # z_ref:  ((K-1)*Gp, Np) f32       acc_ref:(Fp, Np) f32 (resident over e)
    e = pl.program_id(1)
    x_b = x_ref[0]
    s_e = s_ref[0, 0]
    xc = x_b
    for k in range(1, K):
        xc = jnp.dot(xc.astype(s_dtype), s_e, preferred_element_type=jnp.float32)
        z_ref[(k - 1) * Gp:k * Gp, :] = xc
    part = jnp.dot(we_ref[0], z_ref[...], preferred_element_type=jnp.float32)

    @pl.when(e == 0)
    def _init():
        acc_ref[...] = part + jnp.dot(w0_ref[...], x_b,
                                      preferred_element_type=jnp.float32)

    @pl.when(e > 0)
    def _accumulate():
        acc_ref[...] = acc_ref[...] + part

    @pl.when(e == E - 1)
    def _finalize():
        y_ref[0] = (acc_ref[...] + b_ref[...]).astype(y_ref.dtype)


# ----------------------------------------------------------------------------
# Large-N path: S streamed as (Np, TN) column slabs, one edge per grid step.
# Grid = (batch, edge, hop, slab); hop h computes tap k = h + 1.
# ----------------------------------------------------------------------------
def _gf_tiled_kernel(x_ref, s_ref, w0_ref, we_ref, b_ref, y_ref, z_ref, acc_ref,
                     *, E, K, Gp, TN, s_dtype):
    # x_ref:  (1, Gp, Np) f32 (resident per batch)
    # s_ref:  (1, 1, Np, TN) s_dtype — column slab of S[b,e]
    # w0_ref: (Fp, Gp) f32;  we_ref: (1, Fp, (K-1)*Gp) f32;  b_ref: (Fp, 1) f32
    # y_ref:  (1, Fp, Np), resident across (edge, hop, slab)
    # z_ref:  (K*Gp, Np) f32 — tap 0 (=x) + taps 1..K-1 of the current edge
    # acc_ref:(Fp, Np) f32 — accumulates the contraction over edges
    e = pl.program_id(1)
    h = pl.program_id(2)
    j = pl.program_id(3)
    col = pl.multiple_of(j * TN, TN)

    @pl.when(jnp.logical_and(jnp.logical_and(e == 0, h == 0), j == 0))
    def _stage_x():
        z_ref[0:Gp, :] = x_ref[0]                 # tap 0, shared by all edges

    # one diffusion hop for this edge: tap h -> tap h+1 on columns [col,col+TN)
    prev = z_ref[pl.ds(pl.multiple_of(h * Gp, Gp), Gp), :]          # full width
    cur = jnp.dot(prev.astype(s_dtype), s_ref[0, 0],
                  preferred_element_type=jnp.float32)               # (Gp, TN)
    z_ref[pl.ds(pl.multiple_of((h + 1) * Gp, Gp), Gp), pl.ds(col, TN)] = cur

    @pl.when(h == K - 2)                          # last hop: contract this slab
    def _contract():
        zs = z_ref[pl.ds(Gp, (K - 1) * Gp), pl.ds(col, TN)]
        part = jnp.dot(we_ref[0], zs, preferred_element_type=jnp.float32)

        @pl.when(e == 0)
        def _init():
            x_slab = x_ref[0, :, pl.ds(col, TN)]
            acc_ref[:, pl.ds(col, TN)] = part + jnp.dot(
                w0_ref[...], x_slab, preferred_element_type=jnp.float32)

        @pl.when(e > 0)
        def _accumulate():
            acc_ref[:, pl.ds(col, TN)] = acc_ref[:, pl.ds(col, TN)] + part

        @pl.when(e == E - 1)
        def _finalize():
            y_ref[0, :, pl.ds(col, TN)] = (
                acc_ref[:, pl.ds(col, TN)] + b_ref[...]).astype(y_ref.dtype)


# ----------------------------------------------------------------------------
# Wrapper
# ----------------------------------------------------------------------------
def graph_filter(x, S, weight, bias, *, k_taps,
                 s_dtype=jnp.bfloat16,       # dtype for S only (HBM-dominant)
                 max_batch_block=8,
                 force_path=None,            # None | "small" | "edge" | "tiled"
                 tn_max=None):
    """x: [B,G,N], S: [B,E,N,N], weight: [F,E,K,G], bias: [F,1] -> [B,F,N]."""
    B, G, N = x.shape
    E = S.shape[1]
    F = weight.shape[0]
    K = k_taps
    assert S.shape == (B, E, N, N)
    assert weight.shape == (F, E, K, G)
    assert bias.shape == (F, 1)
    out_dtype = x.dtype

    # Lane/sublane-friendly padding (zero padding is exact for diffusion).
    Np = _round_up(N, 128)
    Gp = _round_up(G, 8)
    Fp = _round_up(F, 8)

    x_p = _pad_to(x, (B, Gp, Np)).astype(jnp.float32)
    w_p = _pad_to(weight, (Fp, E, K, Gp)).astype(jnp.float32)
    b_p = _pad_to(bias, (Fp, 1)).astype(jnp.float32)
    w0 = jnp.sum(w_p[:, :, 0, :], axis=1)                       # (Fp, Gp) f32

    cap, usable = _vmem_caps()
    s_isz = jnp.dtype(s_dtype).itemsize
    osz = jnp.dtype(out_dtype).itemsize
    f32 = 4

    # ---------------- K == 1: S never read -> S-free GEMM ----------------
    if K == 1:
        y_p = pl.pallas_call(
            _gf_k1_kernel,
            out_shape=jax.ShapeDtypeStruct((B, Fp, Np), out_dtype),
            grid_spec=pltpu.PrefetchScalarGridSpec(
                num_scalar_prefetch=0,
                grid=(B,),
                in_specs=[
                    pl.BlockSpec((1, Gp, Np), lambda b: (b, 0, 0)),
                    pl.BlockSpec((Fp, Gp), lambda b: (0, 0)),
                    pl.BlockSpec((Fp, 1), lambda b: (0, 0)),
                ],
                out_specs=pl.BlockSpec((1, Fp, Np), lambda b: (b, 0, 0)),
            ),
            compiler_params=pltpu.CompilerParams(
                dimension_semantics=("parallel",),
                vmem_limit_bytes=int(min(cap, 32 << 20))),
        )(x_p, w0, b_p)
        return y_p[:B, :F, :N]

    S_p = _pad_to(S, (B, E, Np, Np)).astype(s_dtype)
    WC = (K - 1) * Gp
    we = jnp.transpose(w_p[:, :, 1:, :], (1, 0, 2, 3)).reshape(E, Fp, WC)
    R = Gp + E * WC

    # ---------------- path selection (VMEM-budget driven) ----------------
    small_fixed = 2 * (Fp * R * f32 + Fp * f32)
    small_per_b = (2 * (Gp * Np * f32 + E * Np * Np * s_isz + Fp * Np * osz)
                   + R * Np * f32)
    small_bb_max = (usable - small_fixed) // small_per_b

    edge_fixed = (2 * (Gp * Np * f32 + Fp * Np * osz + Fp * WC * f32
                       + Fp * Gp * f32 + Fp * f32)
                  + WC * Np * f32 + Fp * Np * f32)
    edge_nbuf = 0
    if edge_fixed + 2 * Np * Np * s_isz <= usable:
        edge_nbuf = 2
    elif edge_fixed + Np * Np * s_isz <= usable:
        edge_nbuf = 1    # single-buffered S still beats the tiled (K-1)x re-read

    if force_path is None:
        path = "small" if small_bb_max >= 1 else ("edge" if edge_nbuf else "tiled")
    else:
        assert force_path in ("small", "edge", "tiled")
        path = force_path
        if path == "edge" and edge_nbuf == 0:
            edge_nbuf = 2

    if path == "small":
        # All E edges of a batch block resident.  Cap Bb at B//2 so there are
        # >= 2 grid steps (v7x megacore on the parallel batch axis + prefetch).
        Bb = int(max(1, min(B, max_batch_block, max(1, B // 2),
                            max(1, small_bb_max))))
        Bp = _round_up(B, Bb)
        x_pp = _pad_to(x_p, (Bp, Gp, Np))
        S_pp = _pad_to(S_p, (Bp, E, Np, Np))
        w_cat = jnp.concatenate(
            [w0, w_p[:, :, 1:, :].reshape(Fp, E * WC)], axis=1)      # (Fp, R)

        kernel = functools.partial(_gf_block_kernel, Bb=Bb, E=E, K=K, Gp=Gp,
                                   Np=Np, s_dtype=s_dtype)
        est = small_fixed + Bb * small_per_b
        y_p = pl.pallas_call(
            kernel,
            out_shape=jax.ShapeDtypeStruct((Bp, Fp, Np), out_dtype),
            grid_spec=pltpu.PrefetchScalarGridSpec(
                num_scalar_prefetch=0,
                grid=(Bp // Bb,),
                in_specs=[
                    pl.BlockSpec((Bb, Gp, Np), lambda b: (b, 0, 0)),
                    pl.BlockSpec((Bb, E, Np, Np), lambda b: (b, 0, 0, 0)),
                    pl.BlockSpec((Fp, R), lambda b: (0, 0)),
                    pl.BlockSpec((Fp, 1), lambda b: (0, 0)),
                ],
                out_specs=pl.BlockSpec((Bb, Fp, Np), lambda b: (b, 0, 0)),
                scratch_shapes=[pltpu.VMEM((R, Bb * Np), jnp.float32)],
            ),
            compiler_params=pltpu.CompilerParams(
                dimension_semantics=("parallel",),
                vmem_limit_bytes=int(min(cap, max(est + (16 << 20), 32 << 20)))),
        )(x_pp, S_pp, w_cat, b_p)

    elif path == "edge":
        kernel = functools.partial(_gf_edge_kernel, E=E, K=K, Gp=Gp,
                                   s_dtype=s_dtype)
        s_kwargs = {}
        if edge_nbuf == 1:
            # One copy of S[b,e] fits but a double-buffered one does not:
            # losing overlap on one DMA per (b,e) is cheaper than tiling.
            s_kwargs["pipeline_mode"] = pl.Buffered(1)
        s_spec = pl.BlockSpec((1, 1, Np, Np), lambda b, e: (b, e, 0, 0),
                              **s_kwargs)
        est = edge_fixed + edge_nbuf * Np * Np * s_isz
        y_p = pl.pallas_call(
            kernel,
            out_shape=jax.ShapeDtypeStruct((B, Fp, Np), out_dtype),
            grid_spec=pltpu.PrefetchScalarGridSpec(
                num_scalar_prefetch=0,
                grid=(B, E),
                in_specs=[
                    pl.BlockSpec((1, Gp, Np), lambda b, e: (b, 0, 0)),
                    s_spec,
                    pl.BlockSpec((Fp, Gp), lambda b, e: (0, 0)),
                    pl.BlockSpec((1, Fp, WC), lambda b, e: (e, 0, 0)),
                    pl.BlockSpec((Fp, 1), lambda b, e: (0, 0)),
                ],
                out_specs=pl.BlockSpec((1, Fp, Np), lambda b, e: (b, 0, 0)),
                scratch_shapes=[pltpu.VMEM((WC, Np), jnp.float32),
                                pltpu.VMEM((Fp, Np), jnp.float32)],
            ),
            compiler_params=pltpu.CompilerParams(
                dimension_semantics=("parallel", "arbitrary"),
                vmem_limit_bytes=int(min(cap, max(est + (16 << 20), 32 << 20)))),
        )(x_p, S_p, w0, we, b_p)

    else:  # "tiled"
        tiled_fixed = (2 * (Gp * Np * f32 + Fp * Np * osz + Fp * WC * f32
                            + Fp * Gp * f32 + Fp * f32)
                       + K * Gp * Np * f32 + Fp * Np * f32)
        slab_budget = max(usable - tiled_fixed, 2 * Np * 128 * s_isz)
        # Column-slab width: largest multiple of 128 dividing Np that fits the
        # budget double-buffered.  Per-row DMA chunk is TN*s_isz bytes, so TN
        # naturally stays >= 512 (f32) / 1024 (bf16) whenever the budget allows.
        cap_tn = Np if tn_max is None else min(Np, _round_up(int(tn_max), 128))
        TN = 128
        for cand in range(cap_tn, 127, -128):
            if Np % cand == 0 and 2 * Np * cand * s_isz <= slab_budget:
                TN = cand
                break
        J = Np // TN
        # Deeper slab pipelining hides DMA bubbles when there is headroom and
        # enough slabs to fill the extra buffer.
        n_buf = 3 if (J >= 3 and 3 * Np * TN * s_isz <= slab_budget) else 2
        s_kwargs = {}
        if n_buf != 2:
            s_kwargs["pipeline_mode"] = pl.Buffered(n_buf)
        s_spec = pl.BlockSpec((1, 1, Np, TN), lambda b, e, h, j: (b, e, 0, j),
                              **s_kwargs)

        kernel = functools.partial(_gf_tiled_kernel, E=E, K=K, Gp=Gp, TN=TN,
                                   s_dtype=s_dtype)
        est = tiled_fixed + n_buf * Np * TN * s_isz
        y_p = pl.pallas_call(
            kernel,
            out_shape=jax.ShapeDtypeStruct((B, Fp, Np), out_dtype),
            grid_spec=pltpu.PrefetchScalarGridSpec(
                num_scalar_prefetch=0,
                grid=(B, E, K - 1, J),
                in_specs=[
                    pl.BlockSpec((1, Gp, Np), lambda b, e, h, j: (b, 0, 0)),
                    s_spec,
                    pl.BlockSpec((Fp, Gp), lambda b, e, h, j: (0, 0)),
                    pl.BlockSpec((1, Fp, WC), lambda b, e, h, j: (e, 0, 0)),
                    pl.BlockSpec((Fp, 1), lambda b, e, h, j: (0, 0)),
                ],
                out_specs=pl.BlockSpec((1, Fp, Np),
                                       lambda b, e, h, j: (b, 0, 0)),
                scratch_shapes=[pltpu.VMEM((K * Gp, Np), jnp.float32),
                                pltpu.VMEM((Fp, Np), jnp.float32)],
            ),
            compiler_params=pltpu.CompilerParams(
                # Output block is resident across (edge, hop, slab): those axes
                # must stay "arbitrary"; only batch is parallel.
                dimension_semantics=("parallel", "arbitrary", "arbitrary",
                                     "arbitrary"),
                vmem_limit_bytes=int(min(cap, max(est + (16 << 20), 32 << 20)))),
        )(x_p, S_p, w0, we, b_p)

    return y_p[:B, :F, :N]


# ----------------------------------------------------------------------------
# Pure-JAX reference (replica of the PyTorch forward) for verification.
# ----------------------------------------------------------------------------
def graph_filter_reference(x, S, weight, bias, *, k_taps):
    B, G, N = x.shape
    E = S.shape[1]
    K = k_taps
    x4 = x.reshape(B, 1, G, N)
    taps = [jnp.broadcast_to(x4, (B, E, G, N))]
    xc = x4
    for _ in range(1, K):
        xc = jnp.matmul(xc, S)                      # [B, E, G, N]
        taps.append(xc)
    z = jnp.stack(taps, axis=2)                     # [B, E, K, G, N]
    return jnp.einsum("bekgn,fekg->bfn", z, weight) + bias[None]


if __name__ == "__main__":
    def make_inputs(key, B, G, F, E, K, N):
        kx, ks, kw = jax.random.split(key, 3)
        x = jax.random.normal(kx, (B, G, N), dtype=jnp.float32)
        S = jax.random.normal(ks, (B, E, N, N), dtype=jnp.float32) / jnp.sqrt(N)
        # Parameter init matching the module: weight ~ N(0.3, 0.1), bias = 0.
        w = 0.3 + 0.1 * jax.random.normal(kw, (F, E, K, G), dtype=jnp.float32)
        b = jnp.zeros((F, 1), dtype=jnp.float32)
        return x, S, w, b

    def check(name, y, y_ref, atol, rtol):
        assert y.shape == y_ref.shape, (name, y.shape, y_ref.shape)
        err = float(jnp.max(jnp.abs(y - y_ref)))
        assert jnp.allclose(y, y_ref, atol=atol, rtol=rtol), \
            f"{name}: max abs err {err}"

    # 1) Small resident path, f32 S (tight check).
    B, G, F, E, K, N = 2, 4, 4, 1, 3, 16
    x, S, w, b = make_inputs(jax.random.PRNGKey(0), B, G, F, E, K, N)
    y = jax.block_until_ready(
        graph_filter(x, S, w, b, k_taps=K, s_dtype=jnp.float32))
    check("small-f32", y, graph_filter_reference(x, S, w, b, k_taps=K),
          atol=1e-2, rtol=1e-2)

    # 2) Multi-edge, ragged G/F/B, default bf16 S (standard configuration).
    B, G, F, E, K, N = 3, 3, 5, 2, 2, 16
    x, S, w, b = make_inputs(jax.random.PRNGKey(1), B, G, F, E, K, N)
    y = jax.block_until_ready(graph_filter(x, S, w, b, k_taps=K))
    check("ragged-bf16S", y, graph_filter_reference(x, S, w, b, k_taps=K),
          atol=1e-1, rtol=1e-1)

    # 3) Per-edge resident path (forced so the demo exercises it at small N).
    B, G, F, E, K, N = 3, 3, 5, 2, 3, 16
    x, S, w, b = make_inputs(jax.random.PRNGKey(2), B, G, F, E, K, N)
    y = jax.block_until_ready(
        graph_filter(x, S, w, b, k_taps=K, s_dtype=jnp.float32,
                     force_path="edge"))
    check("edge-f32", y, graph_filter_reference(x, S, w, b, k_taps=K),
          atol=1e-2, rtol=1e-2)

    # 4) Column-tiled large-N path (forced; small TN so several slabs run).
    B, G, F, E, K, N = 2, 4, 4, 2, 3, 200
    x, S, w, b = make_inputs(jax.random.PRNGKey(3), B, G, F, E, K, N)
    y = jax.block_until_ready(
        graph_filter(x, S, w, b, k_taps=K, s_dtype=jnp.float32,
                     force_path="tiled", tn_max=128))
    check("tiled-f32", y, graph_filter_reference(x, S, w, b, k_taps=K),
          atol=5e-2, rtol=5e-2)

    # 5) K == 1: dedicated S-free kernel (no S DMA at all).
    B, G, F, E, K, N = 2, 4, 4, 2, 1, 16
    x, S, w, b = make_inputs(jax.random.PRNGKey(4), B, G, F, E, K, N)
    y = jax.block_until_ready(graph_filter(x, S, w, b, k_taps=K))
    check("k1", y, graph_filter_reference(x, S, w, b, k_taps=K),
          atol=1e-2, rtol=1e-2)

    print("KERNEL_OK")
</pallas_src>

<mosaic_0001>
module attributes {stable_mosaic.version = 11 : i64} {
  func.func @_gf_block_kernel(%arg0: i32, %arg1: memref<1x8x128xf32, #tpu.memory_space<vmem>>, %arg2: memref<1x1x128x128xf32, #tpu.memory_space<vmem>>, %arg3: memref<8x24xf32, #tpu.memory_space<vmem>>, %arg4: memref<8x1xf32, #tpu.memory_space<vmem>>, %arg5: memref<1x8x128xf32, #tpu.memory_space<vmem>>, %arg6: memref<24x128xf32, #tpu.memory_space<vmem>>) attributes {dimension_semantics = [#tpu.dimension_semantics<parallel>], iteration_bounds = array<i64: 2>, scalar_prefetch = 0 : i64, scratch_operands = 1 : i64, tpu.core_type = #tpu.core_type<tc>, window_params = [{transform_indices = @transform_0, window_bounds = array<i64: 1, 8, 128>}, {transform_indices = @transform_1, window_bounds = array<i64: 1, 1, 128, 128>}, {pipeline_mode = #tpu.pipeline_mode<synchronous>, transform_indices = @transform_2, window_bounds = array<i64: 8, 24>}, {pipeline_mode = #tpu.pipeline_mode<synchronous>, transform_indices = @transform_3, window_bounds = array<i64: 8, 1>}, {transform_indices = @transform_4, window_bounds = array<i64: 1, 8, 128>}]} {
    %c0 = arith.constant 0 : index
    %c0_0 = arith.constant 0 : index
    %c0_1 = arith.constant 0 : index
    %0 = vector.load %arg1[%c0, %c0_0, %c0_1] : memref<1x8x128xf32, #tpu.memory_space<vmem>>, vector<1x8x128xf32>
    %1 = vector.shape_cast %0 : vector<1x8x128xf32> to vector<8x128xf32>
    %c0_2 = arith.constant 0 : index
    %c0_3 = arith.constant 0 : index
    %2 = vector.load %arg6[%c0_2, %c0_3] : memref<24x128xf32, #tpu.memory_space<vmem>>, vector<8x128xf32>
    tpu.vector_store %arg6[%c0_2, %c0_3], %1 {strides = array<i32>} : memref<24x128xf32, #tpu.memory_space<vmem>>, vector<8x128xf32>,
    %c0_4 = arith.constant 0 : index
    %c0_5 = arith.constant 0 : index
    %c0_6 = arith.constant 0 : index
    %c0_7 = arith.constant 0 : index
    %3 = vector.load %arg2[%c0_4, %c0_5, %c0_6, %c0_7] : memref<1x1x128x128xf32, #tpu.memory_space<vmem>>, vector<1x1x128x128xf32>
    %4 = vector.shape_cast %3 : vector<1x1x128x128xf32> to vector<128x128xf32>
    %cst = arith.constant dense<0.000000e+00> : vector<8x128xf32>
    %5 = tpu.matmul %1, %4, %cst {dimension_numbers = #tpu.dot_dimension_numbers<[1], [0], [0], [1], [0, 0, 1, 1], [], []>} : vector<8x128xf32>, vector<128x128xf32>, vector<8x128xf32> -> vector<8x128xf32>
    %c8 = arith.constant 8 : index
    %c0_8 = arith.constant 0 : index
    %6 = vector.load %arg6[%c8, %c0_8] : memref<24x128xf32, #tpu.memory_space<vmem>>, vector<8x128xf32>
    tpu.vector_store %arg6[%c8, %c0_8], %5 {strides = array<i32>} : memref<24x128xf32, #tpu.memory_space<vmem>>, vector<8x128xf32>,
    %cst_9 = arith.constant dense<0.000000e+00> : vector<8x128xf32>
    %7 = tpu.matmul %5, %4, %cst_9 {dimension_numbers = #tpu.dot_dimension_numbers<[1], [0], [0], [1], [0, 0, 1, 1], [], []>} : vector<8x128xf32>, vector<128x128xf32>, vector<8x128xf32> -> vector<8x128xf32>
    %c16 = arith.constant 16 : index
    %c0_10 = arith.constant 0 : index
    %8 = vector.load %arg6[%c16, %c0_10] : memref<24x128xf32, #tpu.memory_space<vmem>>, vector<8x128xf32>
    tpu.vector_store %arg6[%c16, %c0_10], %7 {strides = array<i32>} : memref<24x128xf32, #tpu.memory_space<vmem>>, vector<8x128xf32>,
    %c0_11 = arith.constant 0 : index
    %c0_12 = arith.constant 0 : index
    %9 = vector.load %arg3[%c0_11, %c0_12] : memref<8x24xf32, #tpu.memory_space<vmem>>, vector<8x24xf32>
    %c0_13 = arith.constant 0 : index
    %c0_14 = arith.constant 0 : index
    %10 = vector.load %arg6[%c0_13, %c0_14] : memref<24x128xf32, #tpu.memory_space<vmem>>, vector<24x128xf32>
    %cst_15 = arith.constant dense<0.000000e+00> : vector<8x128xf32>
    %11 = tpu.matmul %9, %10, %cst_15 {dimension_numbers = #tpu.dot_dimension_numbers<[1], [0], [0], [1], [0, 0, 1, 1], [], []>} : vector<8x24xf32>, vector<24x128xf32>, vector<8x128xf32> -> vector<8x128xf32>
    %c0_16 = arith.constant 0 : index
    %c0_17 = arith.constant 0 : index
    %12 = vector.load %arg4[%c0_16, %c0_17] : memref<8x1xf32, #tpu.memory_space<vmem>>, vector<8x1xf32>
    %13 = vector.broadcast %12 : vector<8x1xf32> to vector<8x128xf32>
    %14 = arith.addf %11, %13 : vector<8x128xf32>
    %c0_18 = arith.constant 0 : index
    %c0_19 = arith.constant 0 : index
    %c0_20 = arith.constant 0 : index
    %15 = vector.load %arg5[%c0_18, %c0_19, %c0_20] : memref<1x8x128xf32, #tpu.memory_space<vmem>>, vector<1x8x128xf32>
    %16 = vector.shape_cast %15 : vector<1x8x128xf32> to vector<8x128xf32>
    %17 = vector.shape_cast %14 : vector<8x128xf32> to vector<1x8x128xf32>
    tpu.vector_store %arg5[%c0_18, %c0_19, %c0_20], %17 {strides = array<i32>} : memref<1x8x128xf32, #tpu.memory_space<vmem>>, vector<1x8x128xf32>,
    return
  }
  func.func @transform_0(%arg0: i32) -> (i32, i32, i32) {
    %c0_i32 = arith.constant 0 : i32
    %c0_i32_0 = arith.constant 0 : i32
    %c0_i32_1 = arith.constant 0 : i32
    return %arg0, %c0_i32, %c0_i32_0 : i32, i32, i32
  }
  func.func @transform_1(%arg0: i32) -> (i32, i32, i32, i32) {
    %c0_i32 = arith.constant 0 : i32
    %c0_i32_0 = arith.constant 0 : i32
    %c0_i32_1 = arith.constant 0 : i32
    %c0_i32_2 = arith.constant 0 : i32
    return %arg0, %c0_i32, %c0_i32_0, %c0_i32_1 : i32, i32, i32, i32
  }
  func.func @transform_2(%arg0: i32) -> (i32, i32) {
    %c0_i32 = arith.constant 0 : i32
    %c0_i32_0 = arith.constant 0 : i32
    %c0_i32_1 = arith.constant 0 : i32
    return %c0_i32, %c0_i32_0 : i32, i32
  }
  func.func @transform_3(%arg0: i32) -> (i32, i32) {
    %c0_i32 = arith.constant 0 : i32
    %c0_i32_0 = arith.constant 0 : i32
    %c0_i32_1 = arith.constant 0 : i32
    return %c0_i32, %c0_i32_0 : i32, i32
  }
  func.func @transform_4(%arg0: i32) -> (i32, i32, i32) {
    %c0_i32 = arith.constant 0 : i32
    %c0_i32_0 = arith.constant 0 : i32
    %c0_i32_1 = arith.constant 0 : i32
    return %arg0, %c0_i32, %c0_i32_0 : i32, i32, i32
  }
}

</mosaic_0001>

<llo_original>
// kernel: tpu_custom_call.1
$region0: #{tpu_custom_call.1}
  #allocation0 [shape = 'u32[]', space=smem, size = 0x4, offset = 0x4, fixed_abs, tag = 'smem constant byte address 0x4 - core index']
  #allocation1 [shape = 'u32[144,128]{1,0:T(1,128)}', space=vmem, size = 0x12000, scoped, tag = 'internal scratch']
  #allocation2 [shape = 'f32[24,128]{1,0:T(8,128)}', space=vmem, size = 0x3000, scoped, tag = 'scratch operand']
  %s0 = inlined_call_operand.hbm [shape: f32[2,8,128], index: 0, kind: input, shape index: {}]
  %s1 = inlined_call_operand.hbm [shape: f32[2,1,128,128], index: 1, kind: input, shape index: {}]
  %s2 = inlined_call_operand.vmem [shape: f32[8,24], index: 2, kind: input, shape index: {}]
  %s3 = inlined_call_operand.vmem [shape: f32[8,1], index: 3, kind: input, shape index: {}]
  %s4 = inlined_call_operand.hbm [shape: f32[2,8,128], index: 4, kind: output, shape index: {}]
  %s5 = sld [smem:[#allocation0]]
  $region57: #{tpu_custom_call.1} parent=0
    _
  %s7 = ssub.s32 1, %s5
  %s8 = scalar_select 0, %s7, %s5
  $region1: #{tpu_custom_call.1} parent=0
    #allocation3 [shape = 'u8[8192]{0}', space=vmem, size = 0x2000, scoped, tag = 'input window, operand 0']
    #allocation4 [shape = 's32[2]{0}', space=sflag, size = 0x8, scoped, tag = 'scoped memory for tpu_custom_call.1']
    #allocation5 [shape = 's32[2]{0}', space=sflag, size = 0x8, scoped, tag = 'scoped memory for tpu_custom_call.1']
    #allocation6 [shape = 'u8[131072]{0}', space=vmem, size = 0x20000, scoped, tag = 'input window, operand 1']
    #allocation7 [shape = 's32[2]{0}', space=sflag, size = 0x8, scoped, tag = 'scoped memory for tpu_custom_call.1']
    #allocation8 [shape = 'u8[8192]{0}', space=vmem, size = 0x2000, scoped, tag = 'output window, operand 0']
    %9 = vsyncpa [#allocation4], 0
    %s10 = scalar_lea.sflag [#allocation4], 1
    %11 = vsyncpa %s10, 0
    %12 = vsyncpa [#allocation7], 0
    %s13 = scalar_lea.sflag [#allocation7], 1
    %14 = vsyncpa %s13, 0
    %15 = vsyncpa [#allocation5], 0
    %s16 = scalar_lea.sflag [#allocation5], 1
    %17 = vsyncpa %s16, 0
    loop: start=0, step=1, limit=4
    $region2: #{tpu_custom_call.1} parent=1 // loop_pre_header
      _
    $region3: #{tpu_custom_call.1} parent=1 // loop_header
      %s19 = sphi 0, %s23
      %p20 = scmp.ge.s32.totalorder %s19, 4
      %s29 = sphi 0, %s31
      %s32 = sphi 0, %s29
      %s33 = sphi 0, %s32
      %s49 = sphi 0, %s33
      %s55 = sphi 0, %s57
      %s58 = sphi 0, %s55
      %s59 = sphi 0, %s58
      %s75 = sphi 0, %s59
      %s79 = sphi 0, %s79
      %s81 = sphi 0, %s79
      %s82 = sphi 0, %s81
      %s96 = sphi 0, %s82
      %s100 = sphi 0, %s100
      %s102 = sphi 0, %s100
      %s103 = sphi 0, %s102
      %s117 = sphi 0, %s103
      %s123 = sphi 0, %s125
      %s126 = sphi 0, %s123
      %s127 = sphi 0, %s126
      %s143 = sphi 0, %s127
    $region4: #{tpu_custom_call.1} parent=1 // loop_header_branch
      %22 = sbr.rel (%p20) target = $region8
    $region5: #{tpu_custom_call.1} parent=1 // loop_body
      %s24 = ssub.s32 %s19, 1
      %s25 = ssub.s32 %s19, 2
      %s26 = sadd.s32 %s19, 1
      %s27 = ssub.s32 %s19, %s26
      %p28 = scmp.eq.s32.totalorder %s27, 0
      %s30 = sadd.s32 %s29, 1
      %s31 = scalar_select %p28, %s29, %s30
      %p34 = pneg %p28
      %p35 = scmp.eq.s32.totalorder %s19, 1
      %p36 = por %p34, %p35
      %p37 = scmp.ne.s32.totalorder %s29, %s32
      %p38 = scmp.eq.s32.totalorder %s19, 0
      %p39 = por %p37, %p38
      %p40 = scmp.ne.s32.totalorder %s29, %s32
      %p41 = scmp.eq.s32.totalorder %s24, 1
      %p42 = por %p40, %p41
      %p43 = scmp.ne.s32.totalorder %s32, %s33
      %p44 = scmp.eq.s32.totalorder %s24, 0
      %p45 = por %p43, %p44
      %p46 = scmp.ne.s32.totalorder %s32, %s33
      %p47 = scmp.eq.s32.totalorder %s25, 1
      %p48 = por %p46, %p47
      %p50 = scmp.ne.s32.totalorder %s33, %s49
      %p51 = scmp.eq.s32.totalorder %s25, 0
      %p52 = por %p50, %p51
      %s53 = ssub.s32 %s19, %s26
      %p54 = scmp.eq.s32.totalorder %s53, 0
      %s56 = sadd.s32 %s55, 1
      %s57 = scalar_select %p54, %s55, %s56
      %p60 = pneg %p54
      %p61 = scmp.eq.s32.totalorder %s19, 1
      %p62 = por %p60, %p61
      %p63 = scmp.ne.s32.totalorder %s55, %s58
      %p64 = scmp.eq.s32.totalorder %s19, 0
      %p65 = por %p63, %p64
      %p66 = scmp.ne.s32.totalorder %s55, %s58
      %p67 = scmp.eq.s32.totalorder %s24, 1
      %p68 = por %p66, %p67
      %p69 = scmp.ne.s32.totalorder %s58, %s59
      %p70 = scmp.eq.s32.totalorder %s24, 0
      %p71 = por %p69, %p70
      %p72 = scmp.ne.s32.totalorder %s58, %s59
      %p73 = scmp.eq.s32.totalorder %s25, 1
      %p74 = por %p72, %p73
      %p76 = scmp.ne.s32.totalorder %s59, %s75
      %p77 = scmp.eq.s32.totalorder %s25, 0
      %p78 = por %p76, %p77
      %s80 = sadd.s32 %s79, 1
      %p83 = scmp.eq.s32.totalorder %s19, 1
      %p84 = scmp.ne.s32.totalorder %s79, %s81
      %p85 = scmp.eq.s32.totalorder %s19, 0
      %p86 = por %p84, %p85
      %p87 = scmp.ne.s32.totalorder %s79, %s81
      %p88 = scmp.eq.s32.totalorder %s24, 1
      %p89 = por %p87, %p88
      %p90 = scmp.ne.s32.totalorder %s81, %s82
      %p91 = scmp.eq.s32.totalorder %s24, 0
      %p92 = por %p90, %p91
      %p93 = scmp.ne.s32.totalorder %s81, %s82
      %p94 = scmp.eq.s32.totalorder %s25, 1
      %p95 = por %p93, %p94
      %p97 = scmp.ne.s32.totalorder %s82, %s96
      %p98 = scmp.eq.s32.totalorder %s25, 0
      %p99 = por %p97, %p98
      %s101 = sadd.s32 %s100, 1
      %p104 = scmp.eq.s32.totalorder %s19, 1
      %p105 = scmp.ne.s32.totalorder %s100, %s102
      %p106 = scmp.eq.s32.totalorder %s19, 0
      %p107 = por %p105, %p106
      %p108 = scmp.ne.s32.totalorder %s100, %s102
      %p109 = scmp.eq.s32.totalorder %s24, 1
      %p110 = por %p108, %p109
      %p111 = scmp.ne.s32.totalorder %s102, %s103
      %p112 = scmp.eq.s32.totalorder %s24, 0
      %p113 = por %p111, %p112
      %p114 = scmp.ne.s32.totalorder %s102, %s103
      %p115 = scmp.eq.s32.totalorder %s25, 1
      %p116 = por %p114, %p115
      %p118 = scmp.ne.s32.totalorder %s103, %s117
      %p119 = scmp.eq.s32.totalorder %s25, 0
      %p120 = por %p118, %p119
      %s121 = ssub.s32 %s19, %s26
      %p122 = scmp.eq.s32.totalorder %s121, 0
      %s124 = sadd.s32 %s123, 1
      %s125 = scalar_select %p122, %s123, %s124
      %p128 = pneg %p122
      %p129 = scmp.eq.s32.totalorder %s19, 1
      %p130 = por %p128, %p129
      %p131 = scmp.ne.s32.totalorder %s123, %s126
      %p132 = scmp.eq.s32.totalorder %s19, 0
      %p133 = por %p131, %p132
      %p134 = scmp.ne.s32.totalorder %s123, %s126
      %p135 = scmp.eq.s32.totalorder %s24, 1
      %p136 = por %p134, %p135
      %p137 = scmp.ne.s32.totalorder %s126, %s127
      %p138 = scmp.eq.s32.totalorder %s24, 0
      %p139 = por %p137, %p138
      %p140 = scmp.ne.s32.totalorder %s126, %s127
      %p141 = scmp.eq.s32.totalorder %s25, 1
      %p142 = por %p140, %p141
      %p144 = scmp.ne.s32.totalorder %s127, %s143
      %p145 = scmp.eq.s32.totalorder %s25, 0
      %p146 = por %p144, %p145
      %p147 = scmp.le.s32.totalorder 1, %s19
      %p148 = scmp.lt.s32.totalorder %s19, 3
      %p149 = pnand %p147, %p148
      %p150 = pneg %p149
      // Predicated region
      $region9: #{tpu_custom_call.1} parent=5 // pred_check
        _
      $region10: #{tpu_custom_call.1} parent=5 // pred_check_branch
        %152 = sbr.rel (%p149) target = $region12
      $region11: #{tpu_custom_call.1} parent=5 // pred_region
        %s153 = ssub.s32 %s19, 1
        // Predicated region
        $region13: #{tpu_custom_call.1} parent=11 // pred_check
          %p154 = pneg %p92
        $region14: #{tpu_custom_call.1} parent=11 // pred_check_branch
          %156 = sbr.rel (%p154) target = $region16
        $region15: #{tpu_custom_call.1} parent=11 // pred_region
          _
        $region16: #{tpu_custom_call.1} parent=11 // pred_fallthru
          _
        // Predicated region
        $region17: #{tpu_custom_call.1} parent=11 // pred_check
          %p157 = pneg %p113
        $region18: #{tpu_custom_call.1} parent=11 // pred_check_branch
          %159 = sbr.rel (%p157) target = $region20
        $region19: #{tpu_custom_call.1} parent=11 // pred_region
          _
        $region20: #{tpu_custom_call.1} parent=11 // pred_fallthru
          _
      $region12: #{tpu_custom_call.1} parent=5 // pred_fallthru
        _
      %p160 = scmp.lt.s32.totalorder %s19, 2
      // Predicated region
      $region21: #{tpu_custom_call.1} parent=5 // pred_check
        %p161 = pneg %p160
      $region22: #{tpu_custom_call.1} parent=5 // pred_check_branch
        %163 = sbr.rel (%p161) target = $region24
      $region23: #{tpu_custom_call.1} parent=5 // pred_region
        // Predicated region
        $region25: #{tpu_custom_call.1} parent=23 // pred_check
          %p164 = pneg %p39
        $region26: #{tpu_custom_call.1} parent=23 // pred_check_branch
          %166 = sbr.rel (%p164) target = $region28
        $region27: #{tpu_custom_call.1} parent=23 // pred_region
          %s167 = sand.u32 %s29, 1
          %s168 = scalar_lea.sflag [#allocation4], %s167
          %s169 = sand.u32 %s29, 1
          %s170 = smul.addr %s169, 8
          %s171 = scalar_lea.vmem [#allocation3], %s170
          %s173 = ssub.s32 128, 128
          %174 = vsyncadd %s168, %s173
          %s175 = smul.addr %s19, 128
          %s176 = scalar_lea.hbm %s0, %s175
          %s178 = sshll.u32 %s171, 4
          %s179 = int_to_ptr.vmem [resolvable:$true] %s178
          %181 = dma.hbm_to_vmem [thread:$0]  %s176, 128, %s179, %s168
        $region28: #{tpu_custom_call.1} parent=23 // pred_fallthru
          _
        // Predicated region
        $region29: #{tpu_custom_call.1} parent=23 // pred_check
          %p182 = pneg %p65
        $region30: #{tpu_custom_call.1} parent=23 // pred_check_branch
          %184 = sbr.rel (%p182) target = $region32
        $region31: #{tpu_custom_call.1} parent=23 // pred_region
          %s185 = sand.u32 %s55, 1
          %s186 = scalar_lea.sflag [#allocation7], %s185
          %s187 = sand.u32 %s55, 1
          %s188 = smul.addr %s187, 128
          %s189 = scalar_lea.vmem [#allocation6], %s188
          %s191 = ssub.s32 2048, 2048
          %192 = vsyncadd %s186, %s191
          %s193 = smul.addr %s19, 16
          %s194 = smul.addr %s193, 128
          %s195 = scalar_lea.hbm %s1, %s194
          %s196 = sshll.u32 %s189, 4
          %s197 = int_to_ptr.vmem [resolvable:$true] %s196
          %202 = dma.hbm_to_vmem [thread:$0]  %s195, 2048, %s197, %s186, 128, 128, 8
        $region32: #{tpu_custom_call.1} parent=23 // pred_fallthru
          _
      $region24: #{tpu_custom_call.1} parent=5 // pred_fallthru
        _
      %p203 = scmp.le.s32.totalorder 1, %s19
      %p204 = scmp.lt.s32.totalorder %s19, 3
      %p205 = pnand %p203, %p204
      %p206 = pneg %p205
      // Predicated region
      $region33: #{tpu_custom_call.1} parent=5 // pred_check
        _
      $region34: #{tpu_custom_call.1} parent=5 // pred_check_branch
        %208 = sbr.rel (%p205) target = $region36
      $region35: #{tpu_custom_call.1} parent=5 // pred_region
        %s209 = ssub.s32 %s19, 1
        %s210 = sand.u32 %s32, 1
        %s211 = scalar_lea.sflag [#allocation4], %s210
        %s212 = sand.u32 %s32, 1
        %s213 = smul.addr %s212, 8
        %s214 = scalar_lea.vmem [#allocation3], %s213
        // Predicated region
        $region37: #{tpu_custom_call.1} parent=35 // pred_check
          %p215 = pneg %p45
        $region38: #{tpu_custom_call.1} parent=35 // pred_check_branch
          %217 = sbr.rel (%p215) target = $region40
        $region39: #{tpu_custom_call.1} parent=35 // pred_region
          %218 = dma.done %s211, 128
        $region40: #{tpu_custom_call.1} parent=35 // pred_fallthru
          _
        %s219 = sand.u32 %s58, 1
        %s220 = scalar_lea.sflag [#allocation7], %s219
        %s221 = sand.u32 %s58, 1
        %s222 = smul.addr %s221, 128
        %s223 = scalar_lea.vmem [#allocation6], %s222
        // Predicated region
        $region41: #{tpu_custom_call.1} parent=35 // pred_check
          %p224 = pneg %p71
        $region42: #{tpu_custom_call.1} parent=35 // pred_check_branch
          %226 = sbr.rel (%p224) target = $region44
        $region43: #{tpu_custom_call.1} parent=35 // pred_region
          %227 = dma.done %s220, 2048
        $region44: #{tpu_custom_call.1} parent=35 // pred_fallthru
          _
        %s228 = sand.u32 %s32, 1
        %s229 = scalar_lea.sflag [#allocation4], %s228
        %s230 = sand.u32 %s32, 1
        %s231 = smul.addr %s230, 8
        %s232 = scalar_lea.vmem [#allocation3], %s231
        %p233 = pneg %p45
        %p234 = pneg %p42
        %s235 = sand.u32 %s58, 1
        %s236 = scalar_lea.sflag [#allocation7], %s235
        %s237 = sand.u32 %s58, 1
        %s238 = smul.addr %s237, 128
        %s239 = scalar_lea.vmem [#allocation6], %s238
        %p240 = pneg %p71
        %p241 = pneg %p68
        %p242 = pneg %p92
        %p243 = pneg %p89
        %p244 = pneg %p113
        %p245 = pneg %p110
        %p246 = pneg %p139
        %p247 = pneg %p136
        %s248 = sand.u32 %s126, 1
        %s249 = scalar_lea.sflag [#allocation5], %s248
        %s250 = sand.u32 %s126, 1
        %s251 = smul.addr %s250, 8
        %s252 = scalar_lea.vmem [#allocation8], %s251
        %v253 = vld [vmem:[%s214] sm:$0xff]
        %254 = vst [vmem:[#allocation2] sm:$0xff] %v253
        %v255 = vld [vmem:[%s223] sm:$0xff]
        %v256 = vld [vmem:[%s223 + $0x8] sm:$0xff]
        %v257 = vld [vmem:[%s223 + $0x10] sm:$0xff]
        %v258 = vld [vmem:[%s223 + $0x18] sm:$0xff]
        %v259 = vld [vmem:[%s223 + $0x20] sm:$0xff]
        %v260 = vld [vmem:[%s223 + $0x28] sm:$0xff]
        %v261 = vld [vmem:[%s223 + $0x30] sm:$0xff]
        %v262 = vld [vmem:[%s223 + $0x38] sm:$0xff]
        %v263 = vld [vmem:[%s223 + $0x40] sm:$0xff]
        %v264 = vld [vmem:[%s223 + $0x48] sm:$0xff]
        %v265 = vld [vmem:[%s223 + $0x50] sm:$0xff]
        %v266 = vld [vmem:[%s223 + $0x58] sm:$0xff]
        %v267 = vld [vmem:[%s223 + $0x60] sm:$0xff]
        %v268 = vld [vmem:[%s223 + $0x68] sm:$0xff]
        %v269 = vld [vmem:[%s223 + $0x70] sm:$0xff]
        %v270 = vld [vmem:[%s223 + $0x78] sm:$0xff]
        %271 = vmatprep.subr.mxu0 0.0
        %272 = vmatpush1.msra.mxu0 %v270
        %273 = vmatprep.subr.mxu0 0.0
        %274 = vmatpush1.msra.mxu0 %v269
        %275 = vmatprep.subr.mxu0 0.0
        %276 = vmatpush1.msra.mxu0 %v268
        %277 = vmatprep.subr.mxu0 0.0
        %278 = vmatpush1.msra.mxu0 %v267
        %279 = vmatprep.subr.mxu0 0.0
        %280 = vmatpush1.msra.mxu0 %v266
        %281 = vmatprep.subr.mxu0 0.0
        %282 = vmatpush1.msra.mxu0 %v265
        %283 = vmatprep.subr.mxu0 0.0
        %284 = vmatpush1.msra.mxu0 %v264
        %285 = vmatprep.subr.mxu0 0.0
        %286 = vmatpush1.msra.mxu0 %v263
        %287 = vmatprep.subr.mxu0 0.0
        %288 = vmatpush1.msra.mxu0 %v262
        %289 = vmatprep.subr.mxu0 0.0
        %290 = vmatpush1.msra.mxu0 %v261
        %291 = vmatprep.subr.mxu0 0.0
        %292 = vmatpush1.msra.mxu0 %v260
        %293 = vmatprep.subr.mxu0 0.0
        %294 = vmatpush1.msra.mxu0 %v259
        %295 = vmatprep.subr.mxu0 0.0
        %296 = vmatpush1.msra.mxu0 %v258
        %297 = vmatprep.subr.mxu0 0.0
        %298 = vmatpush1.msra.mxu0 %v257
        %299 = vmatprep.subr.mxu0 0.0
        %300 = vmatpush1.msra.mxu0 %v256
        %301 = vmatprep.subr.mxu0 0.0
        %302 = vmatpush1.msra.mxu0 %v255
        %303 = vmatprep.subr.mxu0 0.0
        %304 = vmatpush2.msra.mxu0 0.0
        %305 = vmatprep.subr.mxu0 0.0
        %306 = vmatpush2.msra.mxu0 0.0
        %307 = vmatprep.subr.mxu0 0.0
        %308 = vmatpush2.msra.mxu0 0.0
        %309 = vmatprep.subr.mxu0 0.0
        %310 = vmatpush2.msra.mxu0 0.0
        %311 = vmatprep.subr.mxu0 0.0
        %312 = vmatpush2.msra.mxu0 0.0
        %313 = vmatprep.subr.mxu0 0.0
        %314 = vmatpush2.msra.mxu0 0.0
        %315 = vmatprep.subr.mxu0 0.0
        %316 = vmatpush2.msra.mxu0 0.0
        %317 = vmatprep.subr.mxu0 0.0
        %318 = vmatpush2.msra.mxu0 0.0
        %319 = vmatprep.subr.mxu0 0.0
        %320 = vmatpush2.msra.mxu0 0.0
        %321 = vmatprep.subr.mxu0 0.0
        %322 = vmatpush2.msra.mxu0 0.0
        %323 = vmatprep.subr.mxu0 0.0
        %324 = vmatpush2.msra.mxu0 0.0
        %325 = vmatprep.subr.mxu0 0.0
        %326 = vmatpush2.msra.mxu0 0.0
        %327 = vmatprep.subr.mxu0 0.0
        %328 = vmatpush2.msra.mxu0 0.0
        %329 = vmatprep.subr.mxu0 0.0
        %330 = vmatpush2.msra.mxu0 0.0
        %331 = vmatprep.subr.mxu0 0.0
        %332 = vmatpush2.msra.mxu0 0.0
        %333 = vmatprep.subr.mxu0 0.0
        %334 = vmatpush2.msra.mxu0 0.0
        %335 = vmatprep.mubr.f32.mxu0 0.0
        %336 = vmatmul.mubr.f32.gmra.mxu0 %v253
        %v337 = vpop.f32.mrf.mxu0
        %v338 = vadd.f32 0.0, %v337
        %v339 = vpop.f32.mrf.mxu0
        %340 = vdwg.mxu0
        %341 = vst [vmem:[#allocation2 + $0x8] sm:$0xff] %v338
        %342 = vmatprep.subr.mxu0 0.0
        %343 = vmatpush1.msra.mxu0 %v270
        %344 = vmatprep.subr.mxu0 0.0
        %345 = vmatpush1.msra.mxu0 %v269
        %346 = vmatprep.subr.mxu0 0.0
        %347 = vmatpush1.msra.mxu0 %v268
        %348 = vmatprep.subr.mxu0 0.0
        %349 = vmatpush1.msra.mxu0 %v267
        %350 = vmatprep.subr.mxu0 0.0
        %351 = vmatpush1.msra.mxu0 %v266
        %352 = vmatprep.subr.mxu0 0.0
        %353 = vmatpush1.msra.mxu0 %v265
        %354 = vmatprep.subr.mxu0 0.0
        %355 = vmatpush1.msra.mxu0 %v264
        %356 = vmatprep.subr.mxu0 0.0
        %357 = vmatpush1.msra.mxu0 %v263
        %358 = vmatprep.subr.mxu0 0.0
        %359 = vmatpush1.msra.mxu0 %v262
        %360 = vmatprep.subr.mxu0 0.0
        %361 = vmatpush1.msra.mxu0 %v261
        %362 = vmatprep.subr.mxu0 0.0
        %363 = vmatpush1.msra.mxu0 %v260
        %364 = vmatprep.subr.mxu0 0.0
        %365 = vmatpush1.msra.mxu0 %v259
        %366 = vmatprep.subr.mxu0 0.0
        %367 = vmatpush1.msra.mxu0 %v258
        %368 = vmatprep.subr.mxu0 0.0
        %369 = vmatpush1.msra.mxu0 %v257
        %370 = vmatprep.subr.mxu0 0.0
        %371 = vmatpush1.msra.mxu0 %v256
        %372 = vmatprep.subr.mxu0 0.0
        %373 = vmatpush1.msra.mxu0 %v255
        %374 = vmatprep.subr.mxu0 0.0
        %375 = vmatpush2.msra.mxu0 0.0
        %376 = vmatprep.subr.mxu0 0.0
        %377 = vmatpush2.msra.mxu0 0.0
        %378 = vmatprep.subr.mxu0 0.0
        %379 = vmatpush2.msra.mxu0 0.0
        %380 = vmatprep.subr.mxu0 0.0
        %381 = vmatpush2.msra.mxu0 0.0
        %382 = vmatprep.subr.mxu0 0.0
        %383 = vmatpush2.msra.mxu0 0.0
        %384 = vmatprep.subr.mxu0 0.0
        %385 = vmatpush2.msra.mxu0 0.0
        %386 = vmatprep.subr.mxu0 0.0
        %387 = vmatpush2.msra.mxu0 0.0
        %388 = vmatprep.subr.mxu0 0.0
        %389 = vmatpush2.msra.mxu0 0.0
        %390 = vmatprep.subr.mxu0 0.0
        %391 = vmatpush2.msra.mxu0 0.0
        %392 = vmatprep.subr.mxu0 0.0
        %393 = vmatpush2.msra.mxu0 0.0
        %394 = vmatprep.subr.mxu0 0.0
        %395 = vmatpush2.msra.mxu0 0.0
        %396 = vmatprep.subr.mxu0 0.0
        %397 = vmatpush2.msra.mxu0 0.0
        %398 = vmatprep.subr.mxu0 0.0
        %399 = vmatpush2.msra.mxu0 0.0
        %400 = vmatprep.subr.mxu0 0.0
        %401 = vmatpush2.msra.mxu0 0.0
        %402 = vmatprep.subr.mxu0 0.0
        %403 = vmatpush2.msra.mxu0 0.0
        %404 = vmatprep.subr.mxu0 0.0
        %405 = vmatpush2.msra.mxu0 0.0
        %406 = vmatprep.mubr.f32.mxu0 0.0
        %407 = vmatmul.mubr.f32.gmra.mxu0 %v338
        %v408 = vpop.f32.mrf.mxu0
        %v409 = vadd.f32 0.0, %v408
        %v410 = vpop.f32.mrf.mxu0
        %411 = vdwg.mxu0
        %412 = vst [vmem:[#allocation2 + $0x10] sm:$0xff] %v409
        %v413 = vld [vmem:[%s2] sm:$0xff]
        %v414 = vld [vmem:[#allocation2] sm:$0xff]
        %v415 = vld [vmem:[#allocation2 + $0x8] sm:$0xff]
        %v416 = vld [vmem:[#allocation2 + $0x10] sm:$0xff]
        %v417 = vld [vmem:[%s3] sm:$0xff]
        %419 = vset.pattern.permute.xlu0 0
        %420 = vperm.xlu0 %419, %v417
        %v421 = vpop.permute.xlu0 %420
        %vm423 = vcmask 195584
        %v425 = vsel %vm423, %v413, 0
        %427 = vmatprep.subr.mxu0 0.0
        %428 = vmatpush1.msra.mxu0 0.0
        %429 = vmatprep.subr.mxu0 0.0
        %430 = vmatpush1.msra.mxu0 0.0
        %431 = vmatprep.subr.mxu0 0.0
        %432 = vmatpush1.msra.mxu0 0.0
        %433 = vmatprep.subr.mxu0 0.0
        %434 = vmatpush1.msra.mxu0 0.0
        %435 = vmatprep.subr.mxu0 0.0
        %436 = vmatpush1.msra.mxu0 0.0
        %437 = vmatprep.subr.mxu0 0.0
        %438 = vmatpush1.msra.mxu0 0.0
        %439 = vmatprep.subr.mxu0 0.0
        %440 = vmatpush1.msra.mxu0 0.0
        %441 = vmatprep.subr.mxu0 0.0
        %442 = vmatpush1.msra.mxu0 0.0
        %443 = vmatprep.subr.mxu0 0.0
        %444 = vmatpush1.msra.mxu0 0.0
        %445 = vmatprep.subr.mxu0 0.0
        %446 = vmatpush1.msra.mxu0 0.0
        %447 = vmatprep.subr.mxu0 0.0
        %448 = vmatpush1.msra.mxu0 0.0
        %449 = vmatprep.subr.mxu0 0.0
        %450 = vmatpush1.msra.mxu0 0.0
        %451 = vmatprep.subr.mxu0 0.0
        %452 = vmatpush1.msra.mxu0 0.0
        %453 = vmatprep.subr.mxu0 0.0
        %454 = vmatpush1.msra.mxu0 %v416
        %455 = vmatprep.subr.mxu0 0.0
        %456 = vmatpush1.msra.mxu0 %v415
        %457 = vmatprep.subr.mxu0 0.0
        %458 = vmatpush1.msra.mxu0 %v414
        %459 = vmatprep.subr.mxu0 0.0
        %460 = vmatpush2.msra.mxu0 0.0
        %461 = vmatprep.subr.mxu0 0.0
        %462 = vmatpush2.msra.mxu0 0.0
        %463 = vmatprep.subr.mxu0 0.0
        %464 = vmatpush2.msra.mxu0 0.0
        %465 = vmatprep.subr.mxu0 0.0
        %466 = vmatpush2.msra.mxu0 0.0
        %467 = vmatprep.subr.mxu0 0.0
        %468 = vmatpush2.msra.mxu0 0.0
        %469 = vmatprep.subr.mxu0 0.0
        %470 = vmatpush2.msra.mxu0 0.0
        %471 = vmatprep.subr.mxu0 0.0
        %472 = vmatpush2.msra.mxu0 0.0
        %473 = vmatprep.subr.mxu0 0.0
        %474 = vmatpush2.msra.mxu0 0.0
        %475 = vmatprep.subr.mxu0 0.0
        %476 = vmatpush2.msra.mxu0 0.0
        %477 = vmatprep.subr.mxu0 0.0
        %478 = vmatpush2.msra.mxu0 0.0
        %479 = vmatprep.subr.mxu0 0.0
        %480 = vmatpush2.msra.mxu0 0.0
        %481 = vmatprep.subr.mxu0 0.0
        %482 = vmatpush2.msra.mxu0 0.0
        %483 = vmatprep.subr.mxu0 0.0
        %484 = vmatpush2.msra.mxu0 0.0
        %485 = vmatprep.subr.mxu0 0.0
        %486 = vmatpush2.msra.mxu0 0.0
        %487 = vmatprep.subr.mxu0 0.0
        %488 = vmatpush2.msra.mxu0 0.0
        %489 = vmatprep.subr.mxu0 0.0
        %490 = vmatpush2.msra.mxu0 0.0
        %491 = vmatprep.mubr.f32.mxu0 0.0
        %492 = vmatmul.mubr.f32.gmra.mxu0 %v425
        %v493 = vpop.f32.mrf.mxu0
        %v494 = vadd.f32 %v421, %v493
        %v495 = vpop.f32.mrf.mxu0
        %496 = vdwg.mxu0
        %497 = vst [vmem:[%s252] sm:$0xff] %v494
        %s498 = sand.u32 %s126, 1
        %s499 = scalar_lea.sflag [#allocation5], %s498
        %s500 = sand.u32 %s126, 1
        %s501 = smul.addr %s500, 8
        %s502 = scalar_lea.vmem [#allocation8], %s501
        // Predicated region
        $region45: #{tpu_custom_call.1} parent=35 // pred_check
          %p503 = pneg %p136
        $region46: #{tpu_custom_call.1} parent=35 // pred_check_branch
          %505 = sbr.rel (%p503) target = $region48
        $region47: #{tpu_custom_call.1} parent=35 // pred_region
          %s507 = ssub.s32 128, 128
          %508 = vsyncadd %s499, %s507
          %s509 = smul.addr %s24, 128
          %s510 = scalar_lea.hbm %s4, %s509
          %s512 = sshll.u32 %s502, 4
          %s513 = int_to_ptr.vmem [resolvable:$true] %s512
          %515 = dma.vmem_to_hbm [thread:$0]  %s513, 128, %s510, %s499
        $region48: #{tpu_custom_call.1} parent=35 // pred_fallthru
          _
      $region36: #{tpu_custom_call.1} parent=5 // pred_fallthru
        _
      %p516 = scmp.le.s32.totalorder 2, %s19
      // Predicated region
      $region49: #{tpu_custom_call.1} parent=5 // pred_check
        %p517 = pneg %p516
      $region50: #{tpu_custom_call.1} parent=5 // pred_check_branch
        %519 = sbr.rel (%p517) target = $region52
      $region51: #{tpu_custom_call.1} parent=5 // pred_region
        %s520 = ssub.s32 %s19, 2
        // Predicated region
        $region53: #{tpu_custom_call.1} parent=51 // pred_check
          %p521 = pneg %p142
        $region54: #{tpu_custom_call.1} parent=51 // pred_check_branch
          %523 = sbr.rel (%p521) target = $region56
        $region55: #{tpu_custom_call.1} parent=51 // pred_region
          %s524 = sand.u32 %s127, 1
          %s525 = scalar_lea.sflag [#allocation5], %s524
          %s526 = sand.u32 %s127, 1
          %s527 = smul.addr %s526, 8
          %s528 = scalar_lea.vmem [#allocation8], %s527
          %529 = dma.done %s525, 128
        $region56: #{tpu_custom_call.1} parent=51 // pred_fallthru
          _
      $region52: #{tpu_custom_call.1} parent=5 // pred_fallthru
        _
    $region6: #{tpu_custom_call.1} parent=1 // loop_footer
      %s23 = sadd.s32 1, %s19
    $region7: #{tpu_custom_call.1} parent=1 // loop_footer_branch
      %18 = sbr.rel target = $region3
    $region8: #{tpu_custom_call.1} parent=1 // loop_exit
      _
    %530 = vsyncpa [#allocation4], 1
    %s531 = scalar_lea.sflag [#allocation4], 1
    %532 = vsyncpa %s531, 1
    %533 = vsyncpa [#allocation7], 1
    %s534 = scalar_lea.sflag [#allocation7], 1
    %535 = vsyncpa %s534, 1
    %536 = vsyncpa [#allocation5], 1
    %s537 = scalar_lea.sflag [#allocation5], 1
    %538 = vsyncpa %s537, 1

</llo_original>
